<compile_context>
chip_gen: v7x
topology: tpu7x:2x2x1
jax: 0.10.0
libtpu: 0.0.40
codegen_flags: <defaults>
</compile_context>

<pallas_src>
import jax
import jax.numpy as jnp
from jax.experimental import pallas as pl
from jax.experimental.pallas import tpu as pltpu


def _round_up(v, m):
    return ((v + m - 1) // m) * m


def _conv1x1_kernel(x_ref, w_ref, b_ref, o_ref):
    # x_ref: (bn, C_in, T)   channels on sublanes, spatial on lanes (dense)
    # w_ref: (C_out, C_in)   full weight matrix, resident across the grid
    # b_ref: (C_out, 1)      bias column, resident across the grid
    # o_ref: (bn, C_out, T)  output tile, lane-dense unmasked stores
    w = w_ref[...]
    b = b_ref[...]
    bn = x_ref.shape[0]
    # bn is a small compile-time constant (<=16): static unroll of 2D MXU dots
    # avoids the (o,b,t)->(b,o,t) transpose a batched einsum would introduce.
    for i in range(bn):
        acc = jnp.dot(w, x_ref[i], preferred_element_type=jnp.float32)
        o_ref[i] = (acc + b).astype(o_ref.dtype)


def conv1x1_pallas(x_nchw, weight, bias, *, target_tile=16384, out_dtype=None,
                   max_batch_fold=16):
    """1x1 conv with the semantics of nn.Conv2d(C_in, C_out, 1) on NCHW input.

    x_nchw: (N, C_in, H, W)
    weight: (C_out, C_in)   (the (1,1) spatial dims of the conv kernel squeezed)
    bias:   (C_out,)
    returns (N, C_out, H, W) in `out_dtype` (defaults to x dtype).
    """
    N, C_in, H, W = x_nchw.shape
    C_out, wc = weight.shape
    assert wc == C_in, (weight.shape, C_in)
    HW = H * W
    out_dtype = jnp.dtype(out_dtype) if out_dtype is not None else x_nchw.dtype

    # Pure reshapes of contiguous trailing dims -- no data movement.
    x = x_nchw.reshape(N, C_in, HW)
    b_col = bias.reshape(C_out, 1)

    x_item = jnp.dtype(x.dtype).itemsize
    o_item = jnp.dtype(out_dtype).itemsize
    cin_pad = _round_up(C_in, 8)     # VMEM sublane padding of the x block
    cout_pad = _round_up(C_out, 8)

    # ---------------- spatial tile ----------------
    if HW <= target_tile:
        tile = HW                    # full rows: one contiguous DMA per image
    else:
        tile = max(128, (target_tile // 128) * 128)

    # Double-buffered per-step working set (with sublane padding), per image.
    def working_set(t, bn):
        return 2 * bn * t * (cin_pad * x_item + cout_pad * o_item)

    VMEM_BUDGET = 40 * 1024 * 1024   # stay well under v7x's 64 MiB physical
    while tile > 256 and working_set(tile, 1) > VMEM_BUDGET:
        tile = max(256, (tile // 2 // 128) * 128)
    n_hw = pl.cdiv(HW, tile)

    # ---------------- batch folding for small images ----------------
    bn = 1
    if n_hw == 1 and N > 1:
        per_img = HW * (cin_pad * x_item + cout_pad * o_item)
        bn_bytes = max(1, (1 << 20) // max(1, per_img))   # ~1 MiB per step
        bn_steps = max(1, N // 4)    # keep >=4 grid steps when N allows (2 TCs)
        bn_target = int(min(N, bn_bytes, bn_steps, max_batch_fold))
        # Largest divisor of N <= bn_target: no ragged batch blocks.
        for d in range(bn_target, 0, -1):
            if N % d == 0:
                bn = d
                break
    elif n_hw == 1 and N == 1 and HW >= 256:
        # A single small image: split spatially so v7x's 2nd TensorCore works.
        tile = max(128, _round_up((HW + 1) // 2, 128))
        n_hw = pl.cdiv(HW, tile)

    grid = (pl.cdiv(N, bn), n_hw)

    # ---------------- VMEM limit (honest bookkeeping, no 32 MiB floor) ------
    w_item = jnp.dtype(weight.dtype).itemsize
    b_item = jnp.dtype(bias.dtype).itemsize
    wb_bytes = (cout_pad * _round_up(C_in, 128) * w_item
                + cout_pad * 128 * b_item)
    est_vmem = working_set(tile, bn) + 2 * wb_bytes
    vmem_limit = int(max(4 * 1024 * 1024, min(48 * 1024 * 1024, 3 * est_vmem)))

    cost = pl.CostEstimate(
        flops=2 * N * HW * C_in * C_out,
        transcendentals=0,
        bytes_accessed=(x_item * N * HW * C_in + o_item * N * HW * C_out
                        + w_item * C_out * C_in + b_item * C_out),
    )

    out = pl.pallas_call(
        _conv1x1_kernel,
        out_shape=jax.ShapeDtypeStruct((N, C_out, HW), out_dtype),
        grid_spec=pltpu.PrefetchScalarGridSpec(
            num_scalar_prefetch=0,
            grid=grid,
            in_specs=[
                # x: bn images per block, channels on sublanes, spatial on lanes
                pl.BlockSpec((bn, C_in, tile), lambda n, j: (n, 0, j)),
                # full weight matrix, resident across the grid (no re-DMA)
                pl.BlockSpec((C_out, C_in), lambda n, j: (0, 0)),
                # bias column, resident across the grid
                pl.BlockSpec((C_out, 1), lambda n, j: (0, 0)),
            ],
            out_specs=pl.BlockSpec((bn, C_out, tile), lambda n, j: (n, 0, j)),
        ),
        compiler_params=pltpu.CompilerParams(
            dimension_semantics=("parallel", "parallel"),
            vmem_limit_bytes=vmem_limit,
        ),
        cost_estimate=cost,
    )(x, weight, b_col)

    # (N, C_out, H*W) -> (N, C_out, H, W): pure reshape, no data movement.
    return out.reshape(N, C_out, H, W)


def init_params(key, c_in=3, hidden_dim=32):
    """Deterministic synthetic init matching nn.Conv2d(c_in, hidden_dim, 1)."""
    k_w, k_b = jax.random.split(key)
    fan_in = c_in  # * 1 * 1
    bound = 1.0 / (fan_in ** 0.5)
    weight = jax.random.uniform(
        k_w, (hidden_dim, c_in), jnp.float32, minval=-bound, maxval=bound)
    bias = jax.random.uniform(
        k_b, (hidden_dim,), jnp.float32, minval=-bound, maxval=bound)
    return weight, bias


if __name__ == "__main__":
    key = jax.random.PRNGKey(0)
    k_x, k_p = jax.random.split(key)

    # Small shapes consistent with the module: NCHW input, 3 input channels.
    N, C_in, H, W = 2, 3, 16, 16
    hidden_dim = 32

    x = jax.random.normal(k_x, (N, C_in, H, W), jnp.float32)
    weight, bias = init_params(k_p, c_in=C_in, hidden_dim=hidden_dim)

    out = conv1x1_pallas(x, weight, bias)
    out = jax.block_until_ready(out)

    # Pure-JAX reference: 1x1 conv == channel einsum + bias.
    ref = jnp.einsum("nchw,oc->nohw", x, weight) + bias[None, :, None, None]
    assert out.shape == (N, hidden_dim, H, W), out.shape
    assert jnp.allclose(out, ref, atol=1e-5, rtol=1e-5), "mismatch vs reference"

    print("KERNEL_OK")
</pallas_src>

<mosaic_0001>
module attributes {stable_mosaic.version = 11 : i64} {
  func.func @_conv1x1_kernel(%arg0: i32, %arg1: i32, %arg2: memref<1x3x256xf32, #tpu.memory_space<vmem>>, %arg3: memref<32x3xf32, #tpu.memory_space<vmem>>, %arg4: memref<32x1xf32, #tpu.memory_space<vmem>>, %arg5: memref<1x32x256xf32, #tpu.memory_space<vmem>>) attributes {dimension_semantics = [#tpu.dimension_semantics<parallel>, #tpu.dimension_semantics<parallel>], iteration_bounds = array<i64: 2, 1>, scalar_prefetch = 0 : i64, scratch_operands = 0 : i64, tpu.core_type = #tpu.core_type<tc>, window_params = [{transform_indices = @transform_0, window_bounds = array<i64: 1, 3, 256>}, {pipeline_mode = #tpu.pipeline_mode<synchronous>, transform_indices = @transform_1, window_bounds = array<i64: 32, 3>}, {pipeline_mode = #tpu.pipeline_mode<synchronous>, transform_indices = @transform_2, window_bounds = array<i64: 32, 1>}, {transform_indices = @transform_3, window_bounds = array<i64: 1, 32, 256>}]} {
    %c0 = arith.constant 0 : index
    %c0_0 = arith.constant 0 : index
    %0 = vector.load %arg3[%c0, %c0_0] : memref<32x3xf32, #tpu.memory_space<vmem>>, vector<32x3xf32>
    %c0_1 = arith.constant 0 : index
    %c0_2 = arith.constant 0 : index
    %1 = vector.load %arg4[%c0_1, %c0_2] : memref<32x1xf32, #tpu.memory_space<vmem>>, vector<32x1xf32>
    %c0_3 = arith.constant 0 : index
    %c0_4 = arith.constant 0 : index
    %c0_5 = arith.constant 0 : index
    %2 = vector.load %arg2[%c0_3, %c0_4, %c0_5] : memref<1x3x256xf32, #tpu.memory_space<vmem>>, vector<1x3x256xf32>
    %3 = vector.shape_cast %2 : vector<1x3x256xf32> to vector<3x256xf32>
    %cst = arith.constant dense<0.000000e+00> : vector<32x256xf32>
    %4 = tpu.matmul %0, %3, %cst {dimension_numbers = #tpu.dot_dimension_numbers<[1], [0], [0], [1], [0, 0, 1, 1], [], []>} : vector<32x3xf32>, vector<3x256xf32>, vector<32x256xf32> -> vector<32x256xf32>
    %5 = vector.broadcast %1 : vector<32x1xf32> to vector<32x256xf32>
    %6 = arith.addf %4, %5 : vector<32x256xf32>
    %c0_6 = arith.constant 0 : index
    %c0_7 = arith.constant 0 : index
    %c0_8 = arith.constant 0 : index
    %7 = vector.load %arg5[%c0_6, %c0_7, %c0_8] : memref<1x32x256xf32, #tpu.memory_space<vmem>>, vector<1x32x256xf32>
    %8 = vector.shape_cast %7 : vector<1x32x256xf32> to vector<32x256xf32>
    %9 = vector.shape_cast %6 : vector<32x256xf32> to vector<1x32x256xf32>
    tpu.vector_store %arg5[%c0_6, %c0_7, %c0_8], %9 {strides = array<i32>} : memref<1x32x256xf32, #tpu.memory_space<vmem>>, vector<1x32x256xf32>,
    return
  }
  func.func @transform_0(%arg0: i32, %arg1: i32) -> (i32, i32, i32) {
    %c0_i32 = arith.constant 0 : i32
    %c0_i32_0 = arith.constant 0 : i32
    return %arg0, %c0_i32, %arg1 : i32, i32, i32
  }
  func.func @transform_1(%arg0: i32, %arg1: i32) -> (i32, i32) {
    %c0_i32 = arith.constant 0 : i32
    %c0_i32_0 = arith.constant 0 : i32
    %c0_i32_1 = arith.constant 0 : i32
    return %c0_i32, %c0_i32_0 : i32, i32
  }
  func.func @transform_2(%arg0: i32, %arg1: i32) -> (i32, i32) {
    %c0_i32 = arith.constant 0 : i32
    %c0_i32_0 = arith.constant 0 : i32
    %c0_i32_1 = arith.constant 0 : i32
    return %c0_i32, %c0_i32_0 : i32, i32
  }
  func.func @transform_3(%arg0: i32, %arg1: i32) -> (i32, i32, i32) {
    %c0_i32 = arith.constant 0 : i32
    %c0_i32_0 = arith.constant 0 : i32
    return %arg0, %c0_i32, %arg1 : i32, i32, i32
  }
}

</mosaic_0001>

<llo_original>
// kernel: tpu_custom_call.1
$region0: #{tpu_custom_call.1}
  #allocation0 [shape = 'u32[]', space=smem, size = 0x4, offset = 0x4, fixed_abs, tag = 'smem constant byte address 0x4 - core index']
  #allocation1 [shape = 'u32[144,128]{1,0:T(1,128)}', space=vmem, size = 0x12000, scoped, tag = 'internal scratch']
  %s0 = inlined_call_operand.vmem [shape: f32[2,3,256], index: 0, kind: input, shape index: {}]
  %s1 = inlined_call_operand.vmem [shape: f32[32,3], index: 1, kind: input, shape index: {}]
  %s2 = inlined_call_operand.vmem [shape: f32[32,1], index: 2, kind: input, shape index: {}]
  %s3 = inlined_call_operand.hbm [shape: f32[2,32,256], index: 3, kind: output, shape index: {}]
  %s4 = sld [smem:[#allocation0]]
  $region45: #{tpu_custom_call.1} parent=0
    _
  %s6 = ssub.s32 1, %s4
  %s7 = scalar_select 0, %s6, %s4
  $region1: #{tpu_custom_call.1} parent=0
    #allocation2 [shape = 'u8[65536]{0}', space=vmem, size = 0x10000, scoped, tag = 'output window, operand 0']
    #allocation3 [shape = 's32[2]{0}', space=sflag, size = 0x8, scoped, tag = 'scoped memory for tpu_custom_call.1']
    %8 = vsyncpa [#allocation3], 0
    %s9 = scalar_lea.sflag [#allocation3], 1
    %10 = vsyncpa %s9, 0
    loop: start=0, step=1, limit=4
    $region2: #{tpu_custom_call.1} parent=1 // loop_pre_header
      _
    $region3: #{tpu_custom_call.1} parent=1 // loop_header
      %s12 = sphi 0, %s16
      %p13 = scmp.ge.s32.totalorder %s12, 4
      %s19 = sphi 0, %s31
      %s20 = sphi 0, %s27
      %s21 = sphi 0, %s19
      %s22 = sphi 0, %s20
      %s23 = sphi 0, %s21
      %s24 = sphi 0, %s22
      %s36 = sphi 0, %s38
      %s39 = sphi 0, %s36
      %s40 = sphi 0, %s39
      %s56 = sphi 0, %s40
      %s60 = sphi 0, %s60
      %s62 = sphi 0, %s60
      %s63 = sphi 0, %s62
      %s77 = sphi 0, %s63
      %s81 = sphi 0, %s81
      %s83 = sphi 0, %s81
      %s84 = sphi 0, %s83
      %s98 = sphi 0, %s84
      %s106 = sphi 0, %s108
      %s109 = sphi 0, %s106
      %s110 = sphi 0, %s109
      %s126 = sphi 0, %s110
    $region4: #{tpu_custom_call.1} parent=1 // loop_header_branch
      %15 = sbr.rel (%p13) target = $region8
    $region5: #{tpu_custom_call.1} parent=1 // loop_body
      %s17 = ssub.s32 %s12, 1
      %s18 = ssub.s32 %s12, 2
      %s25 = sadd.s32 1, %s20
      %p26 = scmp.ge.s32.totalorder %s25, 1
      %s27 = scalar_select %p26, 0, %s25
      %s28 = sadd.s32 1, %s19
      %s29 = scalar_select %p26, %s28, %s19
      %p30 = scmp.ge.s32.totalorder %s29, 2
      %s31 = scalar_select %p30, 0, %s29
      %s32 = ssub.s32 %s19, %s31
      %s33 = ssub.s32 %s20, %s27
      %s34 = sor.u32 %s32, %s33
      %p35 = scmp.eq.s32.totalorder %s34, 0
      %s37 = sadd.s32 %s36, 1
      %s38 = scalar_select %p35, %s36, %s37
      %p41 = pneg %p35
      %p42 = scmp.eq.s32.totalorder %s12, 1
      %p43 = por %p41, %p42
      %p44 = scmp.ne.s32.totalorder %s36, %s39
      %p45 = scmp.eq.s32.totalorder %s12, 0
      %p46 = por %p44, %p45
      %p47 = scmp.ne.s32.totalorder %s36, %s39
      %p48 = scmp.eq.s32.totalorder %s17, 1
      %p49 = por %p47, %p48
      %p50 = scmp.ne.s32.totalorder %s39, %s40
      %p51 = scmp.eq.s32.totalorder %s17, 0
      %p52 = por %p50, %p51
      %p53 = scmp.ne.s32.totalorder %s39, %s40
      %p54 = scmp.eq.s32.totalorder %s18, 1
      %p55 = por %p53, %p54
      %p57 = scmp.ne.s32.totalorder %s40, %s56
      %p58 = scmp.eq.s32.totalorder %s18, 0
      %p59 = por %p57, %p58
      %s61 = sadd.s32 %s60, 1
      %p64 = scmp.eq.s32.totalorder %s12, 1
      %p65 = scmp.ne.s32.totalorder %s60, %s62
      %p66 = scmp.eq.s32.totalorder %s12, 0
      %p67 = por %p65, %p66
      %p68 = scmp.ne.s32.totalorder %s60, %s62
      %p69 = scmp.eq.s32.totalorder %s17, 1
      %p70 = por %p68, %p69
      %p71 = scmp.ne.s32.totalorder %s62, %s63
      %p72 = scmp.eq.s32.totalorder %s17, 0
      %p73 = por %p71, %p72
      %p74 = scmp.ne.s32.totalorder %s62, %s63
      %p75 = scmp.eq.s32.totalorder %s18, 1
      %p76 = por %p74, %p75
      %p78 = scmp.ne.s32.totalorder %s63, %s77
      %p79 = scmp.eq.s32.totalorder %s18, 0
      %p80 = por %p78, %p79
      %s82 = sadd.s32 %s81, 1
      %p85 = scmp.eq.s32.totalorder %s12, 1
      %p86 = scmp.ne.s32.totalorder %s81, %s83
      %p87 = scmp.eq.s32.totalorder %s12, 0
      %p88 = por %p86, %p87
      %p89 = scmp.ne.s32.totalorder %s81, %s83
      %p90 = scmp.eq.s32.totalorder %s17, 1
      %p91 = por %p89, %p90
      %p92 = scmp.ne.s32.totalorder %s83, %s84
      %p93 = scmp.eq.s32.totalorder %s17, 0
      %p94 = por %p92, %p93
      %p95 = scmp.ne.s32.totalorder %s83, %s84
      %p96 = scmp.eq.s32.totalorder %s18, 1
      %p97 = por %p95, %p96
      %p99 = scmp.ne.s32.totalorder %s84, %s98
      %p100 = scmp.eq.s32.totalorder %s18, 0
      %p101 = por %p99, %p100
      %s102 = ssub.s32 %s19, %s31
      %s103 = ssub.s32 %s20, %s27
      %s104 = sor.u32 %s102, %s103
      %p105 = scmp.eq.s32.totalorder %s104, 0
      %s107 = sadd.s32 %s106, 1
      %s108 = scalar_select %p105, %s106, %s107
      %p111 = pneg %p105
      %p112 = scmp.eq.s32.totalorder %s12, 1
      %p113 = por %p111, %p112
      %p114 = scmp.ne.s32.totalorder %s106, %s109
      %p115 = scmp.eq.s32.totalorder %s12, 0
      %p116 = por %p114, %p115
      %p117 = scmp.ne.s32.totalorder %s106, %s109
      %p118 = scmp.eq.s32.totalorder %s17, 1
      %p119 = por %p117, %p118
      %p120 = scmp.ne.s32.totalorder %s109, %s110
      %p121 = scmp.eq.s32.totalorder %s17, 0
      %p122 = por %p120, %p121
      %p123 = scmp.ne.s32.totalorder %s109, %s110
      %p124 = scmp.eq.s32.totalorder %s18, 1
      %p125 = por %p123, %p124
      %p127 = scmp.ne.s32.totalorder %s110, %s126
      %p128 = scmp.eq.s32.totalorder %s18, 0
      %p129 = por %p127, %p128
      %p130 = scmp.le.s32.totalorder 1, %s12
      %p131 = scmp.lt.s32.totalorder %s12, 3
      %p132 = pnand %p130, %p131
      %p133 = pneg %p132
      // Predicated region
      $region9: #{tpu_custom_call.1} parent=5 // pred_check
        _
      $region10: #{tpu_custom_call.1} parent=5 // pred_check_branch
        %135 = sbr.rel (%p132) target = $region12
      $region11: #{tpu_custom_call.1} parent=5 // pred_region
        %s136 = ssub.s32 %s12, 1
        // Predicated region
        $region13: #{tpu_custom_call.1} parent=11 // pred_check
          %p137 = pneg %p73
        $region14: #{tpu_custom_call.1} parent=11 // pred_check_branch
          %139 = sbr.rel (%p137) target = $region16
        $region15: #{tpu_custom_call.1} parent=11 // pred_region
          _
        $region16: #{tpu_custom_call.1} parent=11 // pred_fallthru
          _
        // Predicated region
        $region17: #{tpu_custom_call.1} parent=11 // pred_check
          %p140 = pneg %p94
        $region18: #{tpu_custom_call.1} parent=11 // pred_check_branch
          %142 = sbr.rel (%p140) target = $region20
        $region19: #{tpu_custom_call.1} parent=11 // pred_region
          _
        $region20: #{tpu_custom_call.1} parent=11 // pred_fallthru
          _
      $region12: #{tpu_custom_call.1} parent=5 // pred_fallthru
        _
      %p143 = scmp.lt.s32.totalorder %s12, 2
      // Predicated region
      $region21: #{tpu_custom_call.1} parent=5 // pred_check
        %p144 = pneg %p143
      $region22: #{tpu_custom_call.1} parent=5 // pred_check_branch
        %146 = sbr.rel (%p144) target = $region24
      $region23: #{tpu_custom_call.1} parent=5 // pred_region
        // Predicated region
        $region25: #{tpu_custom_call.1} parent=23 // pred_check
          %p147 = pneg %p46
        $region26: #{tpu_custom_call.1} parent=23 // pred_check_branch
          %149 = sbr.rel (%p147) target = $region28
        $region27: #{tpu_custom_call.1} parent=23 // pred_region
          %s150 = smul.u32 2, %s20
          %p151 = scmp.lt.s32.totalorder %s19, 1
          %s152 = scalar_select %p151, %s19, 1
          %p153 = scmp.lt.s32.totalorder %s150, 1
          %s154 = scalar_select %p153, %s150, 1
          %s155 = smul.addr %s152, 2
          %s156 = sadd.s32 %s154, %s155
          %s157 = smul.addr %s156, 4
          %s158 = scalar_lea.vmem %s0, %s157
          %s159 = smul.u32 2, %s20
        $region28: #{tpu_custom_call.1} parent=23 // pred_fallthru
          _
      $region24: #{tpu_custom_call.1} parent=5 // pred_fallthru
        _
      %p160 = scmp.le.s32.totalorder 1, %s12
      %p161 = scmp.lt.s32.totalorder %s12, 3
      %p162 = pnand %p160, %p161
      %p163 = pneg %p162
      // Predicated region
      $region29: #{tpu_custom_call.1} parent=5 // pred_check
        _
      $region30: #{tpu_custom_call.1} parent=5 // pred_check_branch
        %165 = sbr.rel (%p162) target = $region32
      $region31: #{tpu_custom_call.1} parent=5 // pred_region
        %s166 = ssub.s32 %s12, 1
        %s167 = smul.u32 2, %s22
        %p168 = scmp.lt.s32.totalorder %s21, 1
        %s169 = scalar_select %p168, %s21, 1
        %p170 = scmp.lt.s32.totalorder %s167, 1
        %s171 = scalar_select %p170, %s167, 1
        %s172 = smul.addr %s169, 2
        %s173 = sadd.s32 %s171, %s172
        %s174 = smul.addr %s173, 4
        %s175 = scalar_lea.vmem %s0, %s174
        %p176 = pneg %p52
        %p177 = pneg %p49
        %p178 = pneg %p73
        %p179 = pneg %p70
        %p180 = pneg %p94
        %p181 = pneg %p91
        %p182 = pneg %p122
        %p183 = pneg %p119
        %s184 = sand.u32 %s109, 1
        %s185 = scalar_lea.sflag [#allocation3], %s184
        %s186 = sand.u32 %s109, 1
        %s187 = smul.addr %s186, 64
        %s188 = scalar_lea.vmem [#allocation2], %s187
        %s189 = smul.u32 2, %s22
        %p190 = scmp.lt.s32.totalorder %s21, 1
        %s191 = scalar_select %p190, %s21, 1
        %p192 = scmp.lt.s32.totalorder %s189, 1
        %s193 = scalar_select %p192, %s189, 1
        %s194 = smul.addr %s191, 2
        %s195 = sadd.s32 %s193, %s194
        %s196 = smul.addr %s195, 4
        %s197 = scalar_lea.vmem %s0, %s196
        %s198 = smul.u32 2, %s22
        %s199 = smul.u32 2, %s22
        %v200 = vld [vmem:[%s1] sm:$0xff]
        %v201 = vld [vmem:[%s1 + $0x8] sm:$0xff]
        %v202 = vld [vmem:[%s1 + $0x10] sm:$0xff]
        %v203 = vld [vmem:[%s1 + $0x18] sm:$0xff]
        %v204 = vld [vmem:[%s2] sm:$0xff]
        %v205 = vld [vmem:[%s2 + $0x8] sm:$0xff]
        %v206 = vld [vmem:[%s2 + $0x10] sm:$0xff]
        %v207 = vld [vmem:[%s2 + $0x18] sm:$0xff]
        %v208 = vld [vmem:[%s197] sm:$0x77]
        %210 = vset.pattern.permute.xlu0 0
        %211 = vperm.xlu0 %210, %v204
        %v212 = vpop.permute.xlu0 %211
        %215 = vset.pattern.permute.xlu0 0
        %216 = vperm.xlu0 %215, %v205
        %v217 = vpop.permute.xlu0 %216
        %220 = vset.pattern.permute.xlu0 0
        %221 = vperm.xlu0 %220, %v206
        %v222 = vpop.permute.xlu0 %221
        %225 = vset.pattern.permute.xlu0 0
        %226 = vperm.xlu0 %225, %v207
        %v227 = vpop.permute.xlu0 %226
        %v230 = vcombine.high %v208, %v208
        %vm231 = vcmask 23552
        %v233 = vsel %vm231, %v200, 0
        %v236 = vsel %vm231, %v201, 0
        %v239 = vsel %vm231, %v202, 0
        %v242 = vsel %vm231, %v203, 0
        %vm244 = vcmask 1042432
        %v245 = vsel %vm244, %v208, 0
        %v247 = vsel %vm244, %v230, 0
        %249 = vmatprep.subr.mxu0 %v247
        %250 = vmatpush1.msra.mxu0 %v245
        %251 = vmatprep.subr.mxu0 0.0
        %252 = vmatpush1.msra.mxu0 0.0
        %253 = vmatprep.subr.mxu0 0.0
        %254 = vmatpush1.msra.mxu0 0.0
        %255 = vmatprep.subr.mxu0 0.0
        %256 = vmatpush1.msra.mxu0 0.0
        %257 = vmatprep.subr.mxu0 0.0
        %258 = vmatpush1.msra.mxu0 0.0
        %259 = vmatprep.subr.mxu0 0.0
        %260 = vmatpush1.msra.mxu0 0.0
        %261 = vmatprep.subr.mxu0 0.0
        %262 = vmatpush1.msra.mxu0 0.0
        %263 = vmatprep.subr.mxu0 0.0
        %264 = vmatpush1.msra.mxu0 0.0
        %265 = vmatprep.subr.mxu0 0.0
        %266 = vmatpush1.msra.mxu0 0.0
        %267 = vmatprep.subr.mxu0 0.0
        %268 = vmatpush1.msra.mxu0 0.0
        %269 = vmatprep.subr.mxu0 0.0
        %270 = vmatpush1.msra.mxu0 0.0
        %271 = vmatprep.subr.mxu0 0.0
        %272 = vmatpush1.msra.mxu0 0.0
        %273 = vmatprep.subr.mxu0 0.0
        %274 = vmatpush1.msra.mxu0 0.0
        %275 = vmatprep.subr.mxu0 0.0
        %276 = vmatpush1.msra.mxu0 0.0
        %277 = vmatprep.subr.mxu0 0.0
        %278 = vmatpush1.msra.mxu0 0.0
        %279 = vmatprep.subr.mxu0 0.0
        %280 = vmatpush1.msra.mxu0 0.0
        %281 = vmatprep.subr.mxu0 0.0
        %282 = vmatpush1.msra.mxu0 0.0
        %283 = vmatprep.subr.mxu0 0.0
        %284 = vmatpush1.msra.mxu0 0.0
        %285 = vmatprep.subr.mxu0 0.0
        %286 = vmatpush1.msra.mxu0 0.0
        %287 = vmatprep.subr.mxu0 0.0
        %288 = vmatpush1.msra.mxu0 0.0
        %289 = vmatprep.subr.mxu0 0.0
        %290 = vmatpush1.msra.mxu0 0.0
        %291 = vmatprep.subr.mxu0 0.0
        %292 = vmatpush1.msra.mxu0 0.0
        %293 = vmatprep.subr.mxu0 0.0
        %294 = vmatpush1.msra.mxu0 0.0
        %295 = vmatprep.subr.mxu0 0.0
        %296 = vmatpush1.msra.mxu0 0.0
        %297 = vmatprep.subr.mxu0 0.0
        %298 = vmatpush1.msra.mxu0 0.0
        %299 = vmatprep.subr.mxu0 0.0
        %300 = vmatpush1.msra.mxu0 0.0
        %301 = vmatprep.subr.mxu0 0.0
        %302 = vmatpush1.msra.mxu0 0.0
        %303 = vmatprep.subr.mxu0 0.0
        %304 = vmatpush1.msra.mxu0 0.0
        %305 = vmatprep.subr.mxu0 0.0
        %306 = vmatpush1.msra.mxu0 0.0
        %307 = vmatprep.subr.mxu0 0.0
        %308 = vmatpush1.msra.mxu0 0.0
        %309 = vmatprep.subr.mxu0 0.0
        %310 = vmatpush1.msra.mxu0 0.0
        %311 = vmatprep.subr.mxu0 0.0
        %312 = vmatpush1.msra.mxu0 0.0
        %313 = vmatprep.mubr.f32.mxu0 0.0
        %314 = vmatmul.mubr.f32.gmra.mrb[0].mxu0 %v233
        %v315 = vpop.f32.mrb[0].mxu0
        %v316 = vadd.f32 %v212, %v315
        %v317 = vpop.f32.mrb[0].mxu0
        %v318 = vadd.f32 %v212, %v317
        %319 = vmatprep.mubr.f32.mxu0 0.0
        %320 = vmatmul.mubr.f32.gmra.mrb[0].mxu0 %v236
        %v321 = vpop.f32.mrb[0].mxu0
        %v322 = vadd.f32 %v217, %v321
        %v323 = vpop.f32.mrb[0].mxu0
        %v324 = vadd.f32 %v217, %v323
        %325 = vmatprep.mubr.f32.mxu0 0.0
        %326 = vmatmul.mubr.f32.gmra.mrb[0].mxu0 %v239
        %v327 = vpop.f32.mrb[0].mxu0
        %v328 = vadd.f32 %v222, %v327
        %v329 = vpop.f32.mrb[0].mxu0
        %v330 = vadd.f32 %v222, %v329
        %331 = vmatprep.mubr.f32.mxu0 0.0
        %332 = vmatmul.mubr.f32.gmra.mrb[0].mxu0 %v242
        %v333 = vpop.f32.mrb[0].mxu0
        %v334 = vadd.f32 %v227, %v333
        %v335 = vpop.f32.mrb[0].mxu0
        %v336 = vadd.f32 %v227, %v335
        %337 = vdwg.mxu0
        %338 = vst [vmem:[%s188] sm:$0xff] %v316
        %339 = vst [vmem:[%s188 + $0x8] sm:$0xff] %v318
        %340 = vst [vmem:[%s188 + $0x10] sm:$0xff] %v322
        %341 = vst [vmem:[%s188 + $0x18] sm:$0xff] %v324
        %342 = vst [vmem:[%s188 + $0x20] sm:$0xff] %v328
        %343 = vst [vmem:[%s188 + $0x28] sm:$0xff] %v330
        %344 = vst [vmem:[%s188 + $0x30] sm:$0xff] %v334
        %345 = vst [vmem:[%s188 + $0x38] sm:$0xff] %v336
        %s346 = sand.u32 %s109, 1
        %s347 = scalar_lea.sflag [#allocation3], %s346
        %s348 = sand.u32 %s109, 1
        %s349 = smul.addr %s348, 64
        %s350 = scalar_lea.vmem [#allocation2], %s349
        // Predicated region
        $region33: #{tpu_custom_call.1} parent=31 // pred_check
          %p351 = pneg %p119
        $region34: #{tpu_custom_call.1} parent=31 // pred_check_branch
          %353 = sbr.rel (%p351) target = $region36
        $region35: #{tpu_custom_call.1} parent=31 // pred_region
          %s354 = smul.u32 2, %s22
          %s356 = ssub.s32 1024, 1024
          %357 = vsyncadd %s347, %s356
          %s358 = smul.addr %s21, 8
          %s359 = sadd.s32 %s354, %s358
          %s360 = smul.addr %s359, 128
          %s361 = scalar_lea.hbm %s3, %s360
          %s362 = sshll.u32 %s350, 4
          %s363 = int_to_ptr.vmem [resolvable:$true] %s362
          %368 = dma.vmem_to_hbm [thread:$0]  %s363, 1024, %s361, %s347, 256, 256, 16
        $region36: #{tpu_custom_call.1} parent=31 // pred_fallthru
          _
      $region32: #{tpu_custom_call.1} parent=5 // pred_fallthru
        _
      %p369 = scmp.le.s32.totalorder 2, %s12
      // Predicated region
      $region37: #{tpu_custom_call.1} parent=5 // pred_check
        %p370 = pneg %p369
      $region38: #{tpu_custom_call.1} parent=5 // pred_check_branch
        %372 = sbr.rel (%p370) target = $region40
      $region39: #{tpu_custom_call.1} parent=5 // pred_region
        %s373 = ssub.s32 %s12, 2
        // Predicated region
        $region41: #{tpu_custom_call.1} parent=39 // pred_check
          %p374 = pneg %p125
        $region42: #{tpu_custom_call.1} parent=39 // pred_check_branch
          %376 = sbr.rel (%p374) target = $region44
        $region43: #{tpu_custom_call.1} parent=39 // pred_region
          %s377 = sand.u32 %s110, 1
          %s378 = scalar_lea.sflag [#allocation3], %s377
          %s379 = sand.u32 %s110, 1
          %s380 = smul.addr %s379, 64
          %s381 = scalar_lea.vmem [#allocation2], %s380
          %382 = dma.done %s378, 1024
        $region44: #{tpu_custom_call.1} parent=39 // pred_fallthru
          _
      $region40: #{tpu_custom_call.1} parent=5 // pred_fallthru
        _
    $region6: #{tpu_custom_call.1} parent=1 // loop_footer
      %s16 = sadd.s32 1, %s12
    $region7: #{tpu_custom_call.1} parent=1 // loop_footer_branch
      %11 = sbr.rel target = $region3
    $region8: #{tpu_custom_call.1} parent=1 // loop_exit
      _
    %383 = vsyncpa [#allocation3], 1
    %s384 = scalar_lea.sflag [#allocation3], 1
    %385 = vsyncpa %s384, 1

</llo_original>
